<compile_context>
chip_gen: v6e
topology: v6e:2x2x1
jax: 0.10.0
libtpu: 0.0.40
codegen_flags: <defaults>
</compile_context>

<pallas_src>
import math

import jax
import jax.numpy as jnp
from jax import lax
from jax.experimental import pallas as pl
from jax.experimental.pallas import tpu as pltpu

_LANES = 128
_SUBLANES = 8
_MAX_TILE_ROWS = 4096        # 4096 x 128 f32 = 2 MiB per input block
_CHUNK_ROWS = 128            # inner accumulation chunk (bounds vreg pressure)
_PALLAS_MIN_ELEMS = 16384    # below this, plain XLA reduction is faster


def _pack_rows(dtype) -> int:
    """Sublane packing multiple for the second-minor dim."""
    return {4: 8, 2: 16, 1: 32}.get(jnp.dtype(dtype).itemsize, 8)


def _pick_chunk(tile_rows: int, pack: int) -> int:
    """Largest divisor of tile_rows that is <= _CHUNK_ROWS and a pack multiple."""
    start = min(tile_rows, _CHUNK_ROWS)
    start -= start % pack
    for cand in range(start, pack - 1, -pack):
        if tile_rows % cand == 0:
            return cand
    return tile_rows


def _make_loss_kernel(alpha, beta, inv_n, *, rows, tile_rows, chunk_rows,
                      steps_per_core, need_mask):
    alpha_n = float(alpha) * float(inv_n)
    beta_n = float(beta) * float(inv_n)
    n_chunks = tile_rows // chunk_rows
    groups = chunk_rows // _SUBLANES

    def kernel(o_ref, t_ref, out_ref, acc_d_ref, acc_o_ref):
        c = pl.program_id(0)            # core-split axis ("parallel")
        i = pl.program_id(1)            # reduction axis   ("arbitrary")

        @pl.when(i == 0)
        def _():
            acc_d_ref[...] = jnp.zeros_like(acc_d_ref)
            acc_o_ref[...] = jnp.zeros_like(acc_o_ref)

        # Unclamped logical row offset of this step (used for tail masking).
        row_start = (c * steps_per_core + i) * tile_rows

        def accumulate(masked):
            acc_d = acc_d_ref[...]
            acc_o = acc_o_ref[...]
            for k in range(n_chunks):
                r0 = k * chunk_rows                       # static slice start
                o = o_ref[r0:r0 + chunk_rows, :].astype(jnp.float32)
                t = t_ref[r0:r0 + chunk_rows, :].astype(jnp.float32)
                d = o - t
                d2 = d * d
                o2 = o * o
                if masked:
                    # OOB rows of a partial/phantom block hold undefined data.
                    valid = rows - row_start - r0
                    row_ids = lax.broadcasted_iota(
                        jnp.int32, (chunk_rows, _LANES), 0)
                    keep = row_ids < valid
                    d2 = jnp.where(keep, d2, 0.0)
                    o2 = jnp.where(keep, o2, 0.0)
                # Fold onto the (8,128) accumulators: pure VPU adds, no
                # cross-lane (XLU) reduce in the hot loop.
                acc_d = acc_d + d2.reshape(groups, _SUBLANES, _LANES).sum(axis=0)
                acc_o = acc_o + o2.reshape(groups, _SUBLANES, _LANES).sum(axis=0)
            acc_d_ref[...] = acc_d
            acc_o_ref[...] = acc_o

        if need_mask:
            is_full = row_start + tile_rows <= rows
            @pl.when(is_full)
            def _():
                accumulate(False)          # hot path, no masking overhead
            @pl.when(jnp.logical_not(is_full))
            def _():
                accumulate(True)           # edge tile(s) only
        else:
            accumulate(False)

        @pl.when(i == steps_per_core - 1)
        def _():
            # Scale once at the end; the wrapper sums the (num_cores,8,128)
            # partial planes (tiny plain-XLA reduction).
            out_ref[0, :, :] = alpha_n * acc_d_ref[...] + beta_n * acc_o_ref[...]

    return kernel


def physics_informed_loss(outputs, targets, alpha: float = 1.0, beta: float = 0.1,
                          use_pallas=None):
    """outputs, targets: [batch, pred_len, 3] (any shape). Returns scalar f32 loss."""
    assert outputs.shape == targets.shape, (outputs.shape, targets.shape)
    n_elems = int(math.prod(outputs.shape))
    assert n_elems > 0

    if use_pallas is None:
        use_pallas = n_elems >= _PALLAS_MIN_ELEMS
    if not use_pallas:
        # Small-input fast path: launch/DMA fixed cost would dominate.
        o = outputs.astype(jnp.float32)
        t = targets.astype(jnp.float32)
        return alpha * jnp.mean((o - t) ** 2) + beta * jnp.mean(o * o)

    # ---- lane-dense (rows, 128) view in the NATIVE dtype; minimal zero pad ----
    pack = max(_pack_rows(outputs.dtype), _pack_rows(targets.dtype))
    pad_mult = pack * _LANES
    padded_elems = -(-n_elems // pad_mult) * pad_mult     # pad <= pack*128 - 1
    rows = padded_elems // _LANES

    def to_2d(x):
        flat = x.reshape(-1)
        if padded_elems != n_elems:
            flat = jnp.pad(flat, (0, padded_elems - n_elems))   # zeros: loss-neutral
        return flat.reshape(rows, _LANES)

    o2d = to_2d(outputs)
    t2d = to_2d(targets)

    # ---- tiling ----
    tile_rows = min(_MAX_TILE_ROWS, rows)
    if tile_rows % _CHUNK_ROWS != 0 and tile_rows > 4 * _CHUNK_ROWS:
        tile_rows = (tile_rows // _CHUNK_ROWS) * _CHUNK_ROWS   # keep tiles chunkable
    chunk_rows = _pick_chunk(tile_rows, pack)

    steps_total = -(-rows // tile_rows)
    num_cores = 2 if steps_total >= 2 else 1                   # megacore split (v7x)
    steps_per_core = -(-steps_total // num_cores)
    need_mask = (rows % tile_rows != 0) or (steps_per_core * num_cores != steps_total)

    def block_map(c, i):
        blk = c * steps_per_core + i
        # Phantom steps (uneven core split) re-read the last real block; their
        # contribution is fully masked out inside the kernel.
        return (jnp.minimum(blk, steps_total - 1), 0)

    kernel = _make_loss_kernel(
        alpha, beta, 1.0 / n_elems,
        rows=rows, tile_rows=tile_rows, chunk_rows=chunk_rows,
        steps_per_core=steps_per_core, need_mask=need_mask)

    partials = pl.pallas_call(
        kernel,
        out_shape=jax.ShapeDtypeStruct((num_cores, _SUBLANES, _LANES), jnp.float32),
        grid_spec=pltpu.PrefetchScalarGridSpec(
            num_scalar_prefetch=0,
            grid=(num_cores, steps_per_core),
            in_specs=[
                pl.BlockSpec((tile_rows, _LANES), block_map),
                pl.BlockSpec((tile_rows, _LANES), block_map),
            ],
            out_specs=pl.BlockSpec((1, _SUBLANES, _LANES), lambda c, i: (c, 0, 0)),
            scratch_shapes=[pltpu.VMEM((_SUBLANES, _LANES), jnp.float32),
                            pltpu.VMEM((_SUBLANES, _LANES), jnp.float32)],
        ),
        compiler_params=pltpu.CompilerParams(
            dimension_semantics=("parallel", "arbitrary"),
            vmem_limit_bytes=32 * 1024 * 1024,   # ~10 MiB needed; safe on v5e/v6e/v7x
        ),
    )(o2d, t2d)

    # Tiny final reduction (<= 2*8*128 f32) in plain XLA.
    return jnp.sum(partials)


def _reference_loss(outputs, targets, alpha, beta):
    o = outputs.astype(jnp.float32)
    t = targets.astype(jnp.float32)
    return alpha * jnp.mean((o - t) ** 2) + beta * jnp.mean(o * o)


if __name__ == "__main__":
    key = jax.random.PRNGKey(0)
    alpha, beta = 1.0, 0.1
    ks = jax.random.split(key, 8)

    # 1) Module-spec small shape [batch=2, pred_len=8, 3]; force the Pallas path.
    o_s = jax.random.normal(ks[0], (2, 8, 3), dtype=jnp.float32)
    t_s = jax.random.normal(ks[1], (2, 8, 3), dtype=jnp.float32)
    got = jax.block_until_ready(
        physics_informed_loss(o_s, t_s, alpha, beta, use_pallas=True))
    ref = _reference_loss(o_s, t_s, alpha, beta)
    assert jnp.allclose(got, ref, rtol=1e-5, atol=1e-6), ("small", got, ref)

    # 2) Medium shape: single-tile Pallas path (auto).
    o_m = jax.random.normal(ks[2], (8, 1024, 3), dtype=jnp.float32)
    t_m = jax.random.normal(ks[3], (8, 1024, 3), dtype=jnp.float32)
    got = jax.block_until_ready(physics_informed_loss(o_m, t_m, alpha, beta))
    ref = _reference_loss(o_m, t_m, alpha, beta)
    assert jnp.allclose(got, ref, rtol=1e-5, atol=1e-6), ("medium", got, ref)

    # 3) bf16 inputs streamed in native dtype (kernel upcasts per-tile).
    o_b = jax.random.normal(ks[4], (4, 512, 3), dtype=jnp.bfloat16)
    t_b = jax.random.normal(ks[5], (4, 512, 3), dtype=jnp.bfloat16)
    got = jax.block_until_ready(
        physics_informed_loss(o_b, t_b, alpha, beta, use_pallas=True))
    ref = _reference_loss(o_b, t_b, alpha, beta)
    assert jnp.allclose(got, ref, rtol=1e-4, atol=1e-5), ("bf16", got, ref)

    # 4) Multi-tile case: 2-way core split + partial (masked) last tile.
    o_l = jax.random.normal(ks[6], (64, 4096, 3), dtype=jnp.float32)
    t_l = jax.random.normal(ks[7], (64, 4096, 3), dtype=jnp.float32)
    got = jax.block_until_ready(physics_informed_loss(o_l, t_l, alpha, beta))
    ref = _reference_loss(o_l, t_l, alpha, beta)
    assert jnp.allclose(got, ref, rtol=5e-5, atol=1e-6), ("large", got, ref)

    print("KERNEL_OK")
</pallas_src>

<mosaic_0001>
module attributes {stable_mosaic.version = 11 : i64} {
  func.func @kernel(%arg0: i32, %arg1: i32, %arg2: memref<8x128xf32, #tpu.memory_space<vmem>>, %arg3: memref<8x128xf32, #tpu.memory_space<vmem>>, %arg4: memref<1x8x128xf32, #tpu.memory_space<vmem>>, %arg5: memref<8x128xf32, #tpu.memory_space<vmem>>, %arg6: memref<8x128xf32, #tpu.memory_space<vmem>>) attributes {dimension_semantics = [#tpu.dimension_semantics<parallel>, #tpu.dimension_semantics<arbitrary>], iteration_bounds = array<i64: 1, 1>, scalar_prefetch = 0 : i64, scratch_operands = 2 : i64, tpu.core_type = #tpu.core_type<tc>, window_params = [{transform_indices = @transform_0, window_bounds = array<i64: 8, 128>}, {transform_indices = @transform_1, window_bounds = array<i64: 8, 128>}, {transform_indices = @transform_2, window_bounds = array<i64: 1, 8, 128>}]} {
    %c0_i32 = arith.constant 0 : i32
    %0 = arith.cmpi eq, %arg1, %c0_i32 : i32
    %1 = arith.extui %0 : i1 to i32
    %c0_i32_0 = arith.constant 0 : i32
    %2 = arith.cmpi ne, %1, %c0_i32_0 : i32
    scf.if %2 {
      %cst_15 = arith.constant 0.000000e+00 : f32
      %21 = vector.broadcast %cst_15 : f32 to vector<8x128xf32>
      %c0_16 = arith.constant 0 : index
      %c0_17 = arith.constant 0 : index
      %22 = vector.load %arg5[%c0_16, %c0_17] : memref<8x128xf32, #tpu.memory_space<vmem>>, vector<8x128xf32>
      tpu.vector_store %arg5[%c0_16, %c0_17], %21 {strides = array<i32>} : memref<8x128xf32, #tpu.memory_space<vmem>>, vector<8x128xf32>,
      %cst_18 = arith.constant 0.000000e+00 : f32
      %23 = vector.broadcast %cst_18 : f32 to vector<8x128xf32>
      %c0_19 = arith.constant 0 : index
      %c0_20 = arith.constant 0 : index
      %24 = vector.load %arg6[%c0_19, %c0_20] : memref<8x128xf32, #tpu.memory_space<vmem>>, vector<8x128xf32>
      tpu.vector_store %arg6[%c0_19, %c0_20], %23 {strides = array<i32>} : memref<8x128xf32, #tpu.memory_space<vmem>>, vector<8x128xf32>,
    } else {
    }
    %c0 = arith.constant 0 : index
    %c0_1 = arith.constant 0 : index
    %3 = vector.load %arg5[%c0, %c0_1] : memref<8x128xf32, #tpu.memory_space<vmem>>, vector<8x128xf32>
    %c0_2 = arith.constant 0 : index
    %c0_3 = arith.constant 0 : index
    %4 = vector.load %arg6[%c0_2, %c0_3] : memref<8x128xf32, #tpu.memory_space<vmem>>, vector<8x128xf32>
    %c0_4 = arith.constant 0 : index
    %c0_5 = arith.constant 0 : index
    %5 = vector.load %arg2[%c0_4, %c0_5] : memref<8x128xf32, #tpu.memory_space<vmem>>, vector<8x128xf32>
    %c0_6 = arith.constant 0 : index
    %c0_7 = arith.constant 0 : index
    %6 = vector.load %arg3[%c0_6, %c0_7] : memref<8x128xf32, #tpu.memory_space<vmem>>, vector<8x128xf32>
    %7 = arith.subf %5, %6 : vector<8x128xf32>
    %8 = arith.mulf %7, %7 : vector<8x128xf32>
    %9 = arith.mulf %5, %5 : vector<8x128xf32>
    %10 = vector.shape_cast %8 : vector<8x128xf32> to vector<1x8x128xf32>
    %cst = arith.constant dense<0.000000e+00> : vector<8x128xf32>
    %11 = vector.multi_reduction <add>, %10, %cst [0] : vector<1x8x128xf32> to vector<8x128xf32>
    %12 = arith.addf %3, %11 : vector<8x128xf32>
    %13 = vector.shape_cast %9 : vector<8x128xf32> to vector<1x8x128xf32>
    %cst_8 = arith.constant dense<0.000000e+00> : vector<8x128xf32>
    %14 = vector.multi_reduction <add>, %13, %cst_8 [0] : vector<1x8x128xf32> to vector<8x128xf32>
    %15 = arith.addf %4, %14 : vector<8x128xf32>
    %c0_9 = arith.constant 0 : index
    %c0_10 = arith.constant 0 : index
    %16 = vector.load %arg5[%c0_9, %c0_10] : memref<8x128xf32, #tpu.memory_space<vmem>>, vector<8x128xf32>
    tpu.vector_store %arg5[%c0_9, %c0_10], %12 {strides = array<i32>} : memref<8x128xf32, #tpu.memory_space<vmem>>, vector<8x128xf32>,
    %c0_11 = arith.constant 0 : index
    %c0_12 = arith.constant 0 : index
    %17 = vector.load %arg6[%c0_11, %c0_12] : memref<8x128xf32, #tpu.memory_space<vmem>>, vector<8x128xf32>
    tpu.vector_store %arg6[%c0_11, %c0_12], %15 {strides = array<i32>} : memref<8x128xf32, #tpu.memory_space<vmem>>, vector<8x128xf32>,
    %c0_i32_13 = arith.constant 0 : i32
    %18 = arith.cmpi eq, %arg1, %c0_i32_13 : i32
    %19 = arith.extui %18 : i1 to i32
    %c0_i32_14 = arith.constant 0 : i32
    %20 = arith.cmpi ne, %19, %c0_i32_14 : i32
    scf.if %20 {
      %c0_15 = arith.constant 0 : index
      %c0_16 = arith.constant 0 : index
      %21 = vector.load %arg5[%c0_15, %c0_16] : memref<8x128xf32, #tpu.memory_space<vmem>>, vector<8x128xf32>
      %cst_17 = arith.constant 0.020833334 : f32
      %22 = vector.broadcast %cst_17 : f32 to vector<8x128xf32>
      %23 = arith.mulf %22, %21 : vector<8x128xf32>
      %c0_18 = arith.constant 0 : index
      %c0_19 = arith.constant 0 : index
      %24 = vector.load %arg6[%c0_18, %c0_19] : memref<8x128xf32, #tpu.memory_space<vmem>>, vector<8x128xf32>
      %cst_20 = arith.constant 0.00208333344 : f32
      %25 = vector.broadcast %cst_20 : f32 to vector<8x128xf32>
      %26 = arith.mulf %25, %24 : vector<8x128xf32>
      %27 = arith.addf %23, %26 : vector<8x128xf32>
      %c0_21 = arith.constant 0 : index
      %c0_22 = arith.constant 0 : index
      %c0_23 = arith.constant 0 : index
      %28 = vector.load %arg4[%c0_21, %c0_22, %c0_23] : memref<1x8x128xf32, #tpu.memory_space<vmem>>, vector<1x8x128xf32>
      %29 = vector.shape_cast %28 : vector<1x8x128xf32> to vector<8x128xf32>
      %30 = vector.shape_cast %27 : vector<8x128xf32> to vector<1x8x128xf32>
      tpu.vector_store %arg4[%c0_21, %c0_22, %c0_23], %30 {strides = array<i32>} : memref<1x8x128xf32, #tpu.memory_space<vmem>>, vector<1x8x128xf32>,
    } else {
    }
    return
  }
  func.func @transform_0(%arg0: i32, %arg1: i32) -> (i32, i32) {
    %c1_i32 = arith.constant 1 : i32
    %0 = arith.muli %arg0, %c1_i32 : i32
    %1 = arith.addi %0, %arg1 : i32
    %c0_i32 = arith.constant 0 : i32
    %2 = arith.minsi %1, %c0_i32 : i32
    %c0_i32_0 = arith.constant 0 : i32
    %c0_i32_1 = arith.constant 0 : i32
    return %2, %c0_i32_0 : i32, i32
  }
  func.func @transform_1(%arg0: i32, %arg1: i32) -> (i32, i32) {
    %c1_i32 = arith.constant 1 : i32
    %0 = arith.muli %arg0, %c1_i32 : i32
    %1 = arith.addi %0, %arg1 : i32
    %c0_i32 = arith.constant 0 : i32
    %2 = arith.minsi %1, %c0_i32 : i32
    %c0_i32_0 = arith.constant 0 : i32
    %c0_i32_1 = arith.constant 0 : i32
    return %2, %c0_i32_0 : i32, i32
  }
  func.func @transform_2(%arg0: i32, %arg1: i32) -> (i32, i32, i32) {
    %c0_i32 = arith.constant 0 : i32
    %c0_i32_0 = arith.constant 0 : i32
    %c0_i32_1 = arith.constant 0 : i32
    return %arg0, %c0_i32, %c0_i32_0 : i32, i32, i32
  }
}

</mosaic_0001>

<llo_original>
// kernel: tpu_custom_call.1
$region0: #{tpu_custom_call.1}
  #allocation0 [shape = 'u32[]', space=smem, size = 0x4, offset = 0x4, fixed_abs, tag = 'smem constant byte address 0x4 - core index']
  #allocation1 [shape = 'u32[144,128]{1,0:T(1,128)}', space=vmem, size = 0x12000, scoped, tag = 'internal scratch']
  #allocation2 [shape = 'f32[8,128]{1,0:T(8,128)}', space=vmem, size = 0x1000, scoped, tag = 'scratch operand']
  #allocation3 [shape = 'f32[8,128]{1,0:T(8,128)}', space=vmem, size = 0x1000, scoped, tag = 'scratch operand']
  %s0 = inlined_call_operand.hbm [shape: f32[8,128], index: 0, kind: input, shape index: {}]
  %s1 = inlined_call_operand.hbm [shape: f32[8,128], index: 1, kind: input, shape index: {}]
  %s2 = inlined_call_operand.hbm [shape: f32[1,8,128], index: 2, kind: output, shape index: {}]
  %s3 = sld [smem:[#allocation0]]
  $region34: #{tpu_custom_call.1} parent=0
    _
  %s5 = ssub.s32 1, %s3
  %s6 = scalar_select 0, %s5, %s3
  $region1: #{tpu_custom_call.1} parent=0
    #allocation4 [shape = 'u8[4096]{0}', space=vmem, size = 0x1000, scoped, tag = 'input window, operand 0, single buffered']
    #allocation5 [shape = 's32[1]{0}', space=sflag, size = 0x4, scoped, tag = 'scoped memory for tpu_custom_call.1']
    #allocation6 [shape = 's32[1]{0}', space=sflag, size = 0x4, scoped, tag = 'scoped memory for tpu_custom_call.1']
    #allocation7 [shape = 'u8[4096]{0}', space=vmem, size = 0x1000, scoped, tag = 'input window, operand 1, single buffered']
    #allocation8 [shape = 's32[1]{0}', space=sflag, size = 0x4, scoped, tag = 'scoped memory for tpu_custom_call.1']
    #allocation9 [shape = 'u8[4096]{0}', space=vmem, size = 0x1000, scoped, tag = 'output window, operand 0, single buffered']
    %7 = vsyncpa [#allocation5], 0
    %8 = vsyncpa [#allocation8], 0
    %9 = vsyncpa [#allocation6], 0
    // Predicated region
    $region2: #{tpu_custom_call.1} parent=1 // pred_check
      _
    $region3: #{tpu_custom_call.1} parent=1 // pred_check_branch
      %11 = sbr.rel (0) target = $region5
    $region4: #{tpu_custom_call.1} parent=1 // pred_region
      %s12 = sadd.s32 0, 0
      %p13 = scmp.lt.s32.totalorder %s12, 0
      %s14 = scalar_select %p13, %s12, 0
      %s16 = ssub.s32 128, 128
      %17 = vsyncadd [#allocation5], %s16
      %s18 = smul.addr %s14, 128
      %s19 = scalar_lea.hbm %s0, %s18
      %s21 = sshll.u32 [#allocation4], 4
      %s22 = int_to_ptr.vmem [resolvable:$true] %s21
      %24 = dma.hbm_to_vmem [thread:$0]  %s19, 128, %s22, [#allocation5]
    $region5: #{tpu_custom_call.1} parent=1 // pred_fallthru
      _
    // Predicated region
    $region6: #{tpu_custom_call.1} parent=1 // pred_check
      _
    $region7: #{tpu_custom_call.1} parent=1 // pred_check_branch
      %26 = sbr.rel (0) target = $region9
    $region8: #{tpu_custom_call.1} parent=1 // pred_region
      %s27 = sadd.s32 0, 0
      %p28 = scmp.lt.s32.totalorder %s27, 0
      %s29 = scalar_select %p28, %s27, 0
      %s31 = ssub.s32 128, 128
      %32 = vsyncadd [#allocation8], %s31
      %s33 = smul.addr %s29, 128
      %s34 = scalar_lea.hbm %s1, %s33
      %s36 = sshll.u32 [#allocation7], 4
      %s37 = int_to_ptr.vmem [resolvable:$true] %s36
      %39 = dma.hbm_to_vmem [thread:$0]  %s34, 128, %s37, [#allocation8]
    $region9: #{tpu_custom_call.1} parent=1 // pred_fallthru
      _
    // Predicated region
    $region10: #{tpu_custom_call.1} parent=1 // pred_check
      _
    $region11: #{tpu_custom_call.1} parent=1 // pred_check_branch
      %41 = sbr.rel (0) target = $region13
    $region12: #{tpu_custom_call.1} parent=1 // pred_region
      %42 = dma.done [#allocation5], 128
    $region13: #{tpu_custom_call.1} parent=1 // pred_fallthru
      _
    // Predicated region
    $region14: #{tpu_custom_call.1} parent=1 // pred_check
      _
    $region15: #{tpu_custom_call.1} parent=1 // pred_check_branch
      %44 = sbr.rel (0) target = $region17
    $region16: #{tpu_custom_call.1} parent=1 // pred_region
      %45 = dma.done [#allocation8], 128
    $region17: #{tpu_custom_call.1} parent=1 // pred_fallthru
      _
    %s46 = sadd.s32 0, 0
    %p47 = scmp.lt.s32.totalorder %s46, 0
    %s48 = scalar_select %p47, %s46, 0
    %s49 = sadd.s32 0, 0
    %p50 = scmp.lt.s32.totalorder %s49, 0
    %s51 = scalar_select %p50, %s49, 0
    %p52 = scmp.eq.s32.totalorder 0, 0
    // Predicated region
    $region18: #{tpu_custom_call.1} parent=1 // pred_check
      %p53 = pneg %p52
    $region19: #{tpu_custom_call.1} parent=1 // pred_check_branch
      %55 = sbr.rel (%p53) target = $region21
    $region20: #{tpu_custom_call.1} parent=1 // pred_region
      %56 = vst [vmem:[#allocation2] sm:$0xff] 0.0
      %57 = vst [vmem:[#allocation3] sm:$0xff] 0.0
    $region21: #{tpu_custom_call.1} parent=1 // pred_fallthru
      _
    %v58 = vld [vmem:[#allocation2] sm:$0xff]
    %v59 = vld [vmem:[#allocation3] sm:$0xff]
    %v60 = vld [vmem:[#allocation4] sm:$0xff]
    %v61 = vld [vmem:[#allocation7] sm:$0xff]
    %v62 = vsub.f32 %v60, %v61
    %v63 = vmul.f32 %v62, %v62
    %v64 = vmul.f32 %v60, %v60
    %v65 = vadd.f32 %v63, 0.0
    %v66 = vadd.f32 %v58, %v65
    %v67 = vadd.f32 %v64, 0.0
    %v68 = vadd.f32 %v59, %v67
    %69 = vst [vmem:[#allocation2] sm:$0xff] %v66
    %70 = vst [vmem:[#allocation3] sm:$0xff] %v68
    // Predicated region
    $region22: #{tpu_custom_call.1} parent=1 // pred_check
      %p71 = pneg %p52
    $region23: #{tpu_custom_call.1} parent=1 // pred_check_branch
      %73 = sbr.rel (%p71) target = $region25
    $region24: #{tpu_custom_call.1} parent=1 // pred_region
      %v74 = vld [vmem:[#allocation2] sm:$0xff]
      %v75 = vmul.f32 %v74, 0.020833334
      %v76 = vld [vmem:[#allocation3] sm:$0xff]
      %v77 = vmul.f32 %v76, 0.0020833334
      %v78 = vadd.f32 %v75, %v77
      %79 = vst [vmem:[#allocation9] sm:$0xff] %v78
    $region25: #{tpu_custom_call.1} parent=1 // pred_fallthru
      _
    // Predicated region
    $region26: #{tpu_custom_call.1} parent=1 // pred_check
      _
    $region27: #{tpu_custom_call.1} parent=1 // pred_check_branch
      %81 = sbr.rel (0) target = $region29
    $region28: #{tpu_custom_call.1} parent=1 // pred_region
      %s83 = ssub.s32 128, 128
      %84 = vsyncadd [#allocation6], %s83
      %s86 = sshll.u32 [#allocation9], 4
      %s87 = int_to_ptr.vmem [resolvable:$true] %s86
      %89 = dma.vmem_to_hbm [thread:$0]  %s87, 128, %s2, [#allocation6]
    $region29: #{tpu_custom_call.1} parent=1 // pred_fallthru
      _
    // Predicated region
    $region30: #{tpu_custom_call.1} parent=1 // pred_check
      _
    $region31: #{tpu_custom_call.1} parent=1 // pred_check_branch
      %91 = sbr.rel (0) target = $region33
    $region32: #{tpu_custom_call.1} parent=1 // pred_region
      %92 = dma.done [#allocation6], 128
    $region33: #{tpu_custom_call.1} parent=1 // pred_fallthru
      _
    %93 = vsyncpa [#allocation5], 1
    %94 = vsyncpa [#allocation8], 1
    %95 = vsyncpa [#allocation6], 1

</llo_original>
